<compile_context>
chip_gen: v7x
topology: tpu7x:2x2x1
jax: 0.10.0
libtpu: 0.0.40
codegen_flags: <defaults>
</compile_context>

<pallas_src>
import jax
import jax.numpy as jnp
from jax import lax
from jax.experimental import pallas as pl
from jax.experimental.pallas import tpu as pltpu

# ---------------- model hyperparameters ----------------
BATCH = 2
SEQ = 8
INPUT = 16
HIDDEN = 32
FFNN_DIMS = [64, 16]   # hidden_layers
DROPOUT_P = 0.0        # identity at p=0
LANE = 128             # lane-dense width; 4*HIDDEN == 128 conveniently
BATCH_PAD = 8          # internal batch padded to one full f32 sublane group

# ---- packed parameter slab layout (all segments 8-row aligned) ----
ROW_WIH = 0                        # (INPUT,  128) fused input->gate weights [i|f|g|o]
ROW_WHH = ROW_WIH + INPUT          # (HIDDEN, 128) fused hidden->gate weights
ROW_B   = ROW_WHH + HIDDEN         # (1, 128) combined LSTM bias (padded to 8 rows)
ROW_W1  = ROW_B + 8                # (HIDDEN, 128) FFNN layer 1 (cols >= 64 zero)
ROW_B1  = ROW_W1 + HIDDEN          # (1, 128) bias 1 (padded to 8 rows)
ROW_W2  = ROW_B1 + 8               # (128, 128) FFNN layer 2 (rows >= 64 / cols >= 16 zero)
ROW_B2  = ROW_W2 + LANE            # (1, 128) bias 2 (padded to 8 rows)
SLAB_ROWS = ROW_B2 + 8             # = 232


def _lstm_ffnn_kernel(x_ref, p_ref, out_ref):
    """Whole forward pass in a single Pallas invocation.

    x_ref   : (SEQ*BATCH_PAD, INPUT)  time-major flattened, batch padded to 8 rows
    p_ref   : (SLAB_ROWS, 128)        packed parameter slab (see ROW_* layout)
    out_ref : (BATCH_PAD, 128)        lane-dense output; real logits in [:BATCH, :16]
    """
    # --- static, 8-row-aligned views into the packed parameter slab ---
    wih = p_ref[ROW_WIH:ROW_WIH + INPUT, :]          # (16, 128)
    whh = p_ref[ROW_WHH:ROW_WHH + HIDDEN, :]         # (32, 128)
    b   = p_ref[ROW_B:ROW_B + 1, :]                  # (1, 128)
    w1  = p_ref[ROW_W1:ROW_W1 + HIDDEN, :]           # (32, 128)
    b1  = p_ref[ROW_B1:ROW_B1 + 1, :]                # (1, 128)
    w2  = p_ref[ROW_W2:ROW_W2 + LANE, :]             # (128, 128)
    b2  = p_ref[ROW_B2:ROW_B2 + 1, :]                # (1, 128)

    whh_bf = whh.astype(jnp.bfloat16)                # hoisted bf16 RHS for the recurrence

    # --- hoisted input projection: one bf16 (SEQ*BP, I) @ (I, 4H) matmul, f32 acc ---
    xw = jnp.dot(x_ref[...].astype(jnp.bfloat16), wih.astype(jnp.bfloat16),
                 preferred_element_type=jnp.float32) + b      # (SEQ*BATCH_PAD, 128)

    # Lane constants for sigmoid-via-tanh: g gate (tanh) in lanes [2H, 3H).
    lane = lax.broadcasted_iota(jnp.int32, (BATCH_PAD, 4 * HIDDEN), 1)
    is_g = jnp.logical_and(lane >= 2 * HIDDEN, lane < 3 * HIDDEN)
    sc  = jnp.where(is_g, 1.0, 0.5).astype(jnp.float32)   # input & output scale
    off = jnp.where(is_g, 0.0, 0.5).astype(jnp.float32)   # output offset

    h = jnp.zeros((BATCH_PAD, HIDDEN), jnp.float32)
    c = jnp.zeros((BATCH_PAD, HIDDEN), jnp.float32)

    # SEQ is static and tiny -> fully unrolled recurrence; h/c stay in vregs.
    # Per step: one bf16 MXU op + one EUP tanh over the 128-lane gate vreg
    # (+ the cheap tanh(c)) on the serial critical path.
    for t in range(SEQ):
        # Whole-vreg static slice: rows [8t, 8t+8) == one full f32 sublane group.
        xw_t = xw[t * BATCH_PAD:(t + 1) * BATCH_PAD, :]
        gates = xw_t + jnp.dot(h.astype(jnp.bfloat16), whh_bf,
                               preferred_element_type=jnp.float32)   # (BP, 128) f32
        # sigmoid(x) = 0.5*tanh(0.5*x) + 0.5 -> single tanh covers all four gates.
        tnh = jnp.tanh(gates * sc)
        act = tnh * sc + off
        i = act[:, 0 * HIDDEN:1 * HIDDEN]
        f = act[:, 1 * HIDDEN:2 * HIDDEN]
        g = act[:, 2 * HIDDEN:3 * HIDDEN]
        o = act[:, 3 * HIDDEN:4 * HIDDEN]
        c = f * c + i * g
        h = o * jnp.tanh(c)

    # FFNN head: LinearBlock0 (H -> 64) -> ReLU, LinearBlock1 (64 -> 16) -> ReLU.
    # Off the serial path; f32 matmuls, zero-padded to 128 lanes (padding contributes 0).
    y1 = jnp.maximum(jnp.dot(h, w1, preferred_element_type=jnp.float32) + b1, 0.0)
    y2 = jnp.maximum(jnp.dot(y1, w2, preferred_element_type=jnp.float32) + b2, 0.0)
    out_ref[...] = y2.astype(out_ref.dtype)          # unmasked (8, 128) vst


def rec_model_forward(x, params):
    """x: (BATCH, SEQ, INPUT) batch-first (PyTorch batch_first=True convention)."""
    bsz = x.shape[0]
    # Pad batch to 8 rows and go time-major so every per-step access in the kernel
    # is a whole-vreg static slice.  This prep is ~4 KiB of data; negligible.
    x_pad = jnp.zeros((BATCH_PAD, SEQ, INPUT), x.dtype).at[:bsz].set(x)
    x_tm = jnp.transpose(x_pad, (1, 0, 2)).reshape(SEQ * BATCH_PAD, INPUT)

    vmem = pl.BlockSpec(memory_space=pltpu.MemorySpace.VMEM)
    out_padded = pl.pallas_call(
        _lstm_ffnn_kernel,
        out_shape=jax.ShapeDtypeStruct((BATCH_PAD, LANE), jnp.float32),
        in_specs=[vmem, vmem],      # 2 inputs -> 2 DMAs (was 8)
        out_specs=vmem,
    )(x_tm, params["slab"])
    return out_padded[:bsz, :FFNN_DIMS[1]]


def init_params(key):
    """Deterministic init, PyTorch-like uniform(-1/sqrt(H), 1/sqrt(H))."""
    ks = jax.random.split(key, 8)

    def u(k, shape, scale):
        return jax.random.uniform(k, shape, jnp.float32, -scale, scale)

    s = 1.0 / jnp.sqrt(jnp.float32(HIDDEN))
    # LSTM weights in PyTorch layout (gate chunk order [i, f, g, o]), then fused.
    w_ih = u(ks[0], (4 * HIDDEN, INPUT), s)       # (4H, I)
    w_hh = u(ks[1], (4 * HIDDEN, HIDDEN), s)      # (4H, H)
    b_ih = u(ks[2], (4 * HIDDEN,), s)
    b_hh = u(ks[3], (4 * HIDDEN,), s)

    wih_f = w_ih.T                                # (I, 4H), cols ordered [i|f|g|o]
    whh_f = w_hh.T                                # (H, 4H)
    b_f = (b_ih + b_hh).reshape(1, 4 * HIDDEN)    # (1, 4H)

    s1 = 1.0 / jnp.sqrt(jnp.float32(HIDDEN))
    w1 = u(ks[4], (FFNN_DIMS[0], HIDDEN), s1)     # (64, 32)
    b1 = u(ks[5], (FFNN_DIMS[0],), s1)
    s2 = 1.0 / jnp.sqrt(jnp.float32(FFNN_DIMS[0]))
    w2 = u(ks[6], (FFNN_DIMS[1], FFNN_DIMS[0]), s2)  # (16, 64)
    b2 = u(ks[7], (FFNN_DIMS[1],), s2)

    # ---- single packed (SLAB_ROWS, 128) parameter slab, zero-padded lanes/rows ----
    slab = jnp.zeros((SLAB_ROWS, LANE), jnp.float32)
    slab = slab.at[ROW_WIH:ROW_WIH + INPUT, :].set(wih_f)
    slab = slab.at[ROW_WHH:ROW_WHH + HIDDEN, :].set(whh_f)
    slab = slab.at[ROW_B, :].set(b_f[0])
    slab = slab.at[ROW_W1:ROW_W1 + HIDDEN, :FFNN_DIMS[0]].set(w1.T)
    slab = slab.at[ROW_B1, :FFNN_DIMS[0]].set(b1)
    slab = slab.at[ROW_W2:ROW_W2 + FFNN_DIMS[0], :FFNN_DIMS[1]].set(w2.T)
    slab = slab.at[ROW_B2, :FFNN_DIMS[1]].set(b2)

    return {
        "slab": slab,
        # logical weights kept for the pure-JAX reference
        "wih_f": wih_f, "whh_f": whh_f, "b_f": b_f,
        "w1": w1, "b1": b1, "w2": w2, "b2": b2,
    }


def reference_forward(x, params, emulate_bf16=False):
    """Pure-JAX reference of the same math.

    emulate_bf16=True reproduces the kernel's bf16 MXU operands (f32 accumulate,
    f32 state) for a tight bit-level-ish check; False is the plain f32 model.
    """
    wih, whh, b = params["wih_f"], params["whh_f"], params["b_f"]
    cast = (lambda a: a.astype(jnp.bfloat16)) if emulate_bf16 else (lambda a: a)

    def cell(carry, x_t):
        h, c = carry
        gates = (jnp.dot(cast(x_t), cast(wih), preferred_element_type=jnp.float32)
                 + jnp.dot(cast(h), cast(whh), preferred_element_type=jnp.float32)
                 + b)
        i, f, g, o = jnp.split(gates, 4, axis=-1)
        i = jax.nn.sigmoid(i)
        f = jax.nn.sigmoid(f)
        g = jnp.tanh(g)
        o = jax.nn.sigmoid(o)
        c = f * c + i * g
        h = o * jnp.tanh(c)
        return (h, c), None

    h0 = jnp.zeros((x.shape[0], HIDDEN), jnp.float32)
    c0 = jnp.zeros_like(h0)
    (h, _), _ = lax.scan(cell, (h0, c0), jnp.transpose(x, (1, 0, 2)))

    y1 = jnp.maximum(h @ params["w1"].T + params["b1"], 0.0)
    y2 = jnp.maximum(y1 @ params["w2"].T + params["b2"], 0.0)
    return y2


if __name__ == "__main__":
    key = jax.random.PRNGKey(0)
    kx, kp = jax.random.split(key)
    x = jax.random.normal(kx, (BATCH, SEQ, INPUT), jnp.float32)
    params = init_params(kp)

    out = jax.block_until_ready(rec_model_forward(x, params))
    assert out.shape == (BATCH, FFNN_DIMS[1])

    # Tight check: kernel implements exactly the bf16-operand / f32-state math.
    ref_bf16 = reference_forward(x, params, emulate_bf16=True)
    assert jnp.allclose(out, ref_bf16, rtol=1e-4, atol=1e-4)

    # Loose check against the full-f32 model: bf16 MXU operands introduce only
    # small rounding over the 8-step recurrence (state/elementwise kept f32).
    ref_f32 = reference_forward(x, params, emulate_bf16=False)
    assert jnp.allclose(out, ref_f32, rtol=2e-2, atol=2e-2)

    print("KERNEL_OK")
</pallas_src>

<mosaic_0001>
module attributes {stable_mosaic.version = 11 : i64} {
  func.func @_lstm_ffnn_kernel(%arg0: memref<64x16xf32, #tpu.memory_space<vmem>>, %arg1: memref<232x128xf32, #tpu.memory_space<vmem>>, %arg2: memref<8x128xf32, #tpu.memory_space<vmem>>) attributes {dimension_semantics = [], scalar_prefetch = 0 : i64, scratch_operands = 0 : i64, tpu.core_type = #tpu.core_type<tc>} {
    %c0 = arith.constant 0 : index
    %c0_0 = arith.constant 0 : index
    %0 = vector.load %arg1[%c0, %c0_0] : memref<232x128xf32, #tpu.memory_space<vmem>>, vector<16x128xf32>
    %c16 = arith.constant 16 : index
    %c0_1 = arith.constant 0 : index
    %1 = vector.load %arg1[%c16, %c0_1] : memref<232x128xf32, #tpu.memory_space<vmem>>, vector<32x128xf32>
    %c48 = arith.constant 48 : index
    %c0_2 = arith.constant 0 : index
    %2 = vector.load %arg1[%c48, %c0_2] : memref<232x128xf32, #tpu.memory_space<vmem>>, vector<1x128xf32>
    %c56 = arith.constant 56 : index
    %c0_3 = arith.constant 0 : index
    %3 = vector.load %arg1[%c56, %c0_3] : memref<232x128xf32, #tpu.memory_space<vmem>>, vector<32x128xf32>
    %c88 = arith.constant 88 : index
    %c0_4 = arith.constant 0 : index
    %4 = vector.load %arg1[%c88, %c0_4] : memref<232x128xf32, #tpu.memory_space<vmem>>, vector<1x128xf32>
    %c96 = arith.constant 96 : index
    %c0_5 = arith.constant 0 : index
    %5 = vector.load %arg1[%c96, %c0_5] : memref<232x128xf32, #tpu.memory_space<vmem>>, vector<128x128xf32>
    %c224 = arith.constant 224 : index
    %c0_6 = arith.constant 0 : index
    %6 = vector.load %arg1[%c224, %c0_6] : memref<232x128xf32, #tpu.memory_space<vmem>>, vector<1x128xf32>
    %7 = arith.truncf %1 : vector<32x128xf32> to vector<32x128xbf16>
    %c0_7 = arith.constant 0 : index
    %c0_8 = arith.constant 0 : index
    %8 = vector.load %arg0[%c0_7, %c0_8] : memref<64x16xf32, #tpu.memory_space<vmem>>, vector<64x16xf32>
    %9 = arith.truncf %8 : vector<64x16xf32> to vector<64x16xbf16>
    %10 = arith.truncf %0 : vector<16x128xf32> to vector<16x128xbf16>
    %cst = arith.constant dense<0.000000e+00> : vector<64x128xf32>
    %11 = tpu.matmul %9, %10, %cst {dimension_numbers = #tpu.dot_dimension_numbers<[1], [0], [0], [1], [0, 0, 1, 1], [], []>} : vector<64x16xbf16>, vector<16x128xbf16>, vector<64x128xf32> -> vector<64x128xf32>
    %12 = vector.broadcast %2 : vector<1x128xf32> to vector<64x128xf32>
    %13 = arith.addf %11, %12 : vector<64x128xf32>
    %14 = tpu.iota {dimensions = array<i32: 1>} : vector<8x128xi32>
    %c64_i32 = arith.constant 64 : i32
    %15 = vector.broadcast %c64_i32 : i32 to vector<8x128xi32>
    %16 = arith.cmpi sge, %14, %15 : vector<8x128xi32>
    %c96_i32 = arith.constant 96 : i32
    %17 = vector.broadcast %c96_i32 : i32 to vector<8x128xi32>
    %18 = arith.cmpi slt, %14, %17 : vector<8x128xi32>
    %19 = arith.andi %16, %18 : vector<8x128xi1>
    %cst_9 = arith.constant 1.000000e+00 : f32
    %cst_10 = arith.constant 5.000000e-01 : f32
    %20 = vector.broadcast %cst_9 : f32 to vector<8x128xf32>
    %21 = vector.broadcast %cst_10 : f32 to vector<8x128xf32>
    %22 = arith.select %19, %20, %21 : vector<8x128xi1>, vector<8x128xf32>
    %cst_11 = arith.constant 0.000000e+00 : f32
    %cst_12 = arith.constant 5.000000e-01 : f32
    %23 = vector.broadcast %cst_11 : f32 to vector<8x128xf32>
    %24 = vector.broadcast %cst_12 : f32 to vector<8x128xf32>
    %25 = arith.select %19, %23, %24 : vector<8x128xi1>, vector<8x128xf32>
    %cst_13 = arith.constant 0.000000e+00 : f32
    %26 = vector.broadcast %cst_13 : f32 to vector<8x32xf32>
    %cst_14 = arith.constant 0.000000e+00 : f32
    %27 = vector.broadcast %cst_14 : f32 to vector<8x32xf32>
    %28 = vector.extract_strided_slice %13 {offsets = [0, 0], sizes = [8, 128], strides = [1, 1]} : vector<64x128xf32> to vector<8x128xf32>
    %29 = arith.truncf %26 : vector<8x32xf32> to vector<8x32xbf16>
    %cst_15 = arith.constant dense<0.000000e+00> : vector<8x128xf32>
    %30 = tpu.matmul %29, %7, %cst_15 {dimension_numbers = #tpu.dot_dimension_numbers<[1], [0], [0], [1], [0, 0, 1, 1], [], []>} : vector<8x32xbf16>, vector<32x128xbf16>, vector<8x128xf32> -> vector<8x128xf32>
    %31 = arith.addf %28, %30 : vector<8x128xf32>
    %32 = arith.mulf %31, %22 : vector<8x128xf32>
    %33 = math.tanh %32 : vector<8x128xf32>
    %34 = arith.mulf %33, %22 : vector<8x128xf32>
    %35 = arith.addf %34, %25 : vector<8x128xf32>
    %36 = vector.extract_strided_slice %35 {offsets = [0, 0], sizes = [8, 32], strides = [1, 1]} : vector<8x128xf32> to vector<8x32xf32>
    %37 = vector.extract_strided_slice %35 {offsets = [0, 32], sizes = [8, 32], strides = [1, 1]} : vector<8x128xf32> to vector<8x32xf32>
    %38 = vector.extract_strided_slice %35 {offsets = [0, 64], sizes = [8, 32], strides = [1, 1]} : vector<8x128xf32> to vector<8x32xf32>
    %39 = vector.extract_strided_slice %35 {offsets = [0, 96], sizes = [8, 32], strides = [1, 1]} : vector<8x128xf32> to vector<8x32xf32>
    %40 = arith.mulf %37, %27 : vector<8x32xf32>
    %41 = arith.mulf %36, %38 : vector<8x32xf32>
    %42 = arith.addf %40, %41 : vector<8x32xf32>
    %43 = math.tanh %42 : vector<8x32xf32>
    %44 = arith.mulf %39, %43 : vector<8x32xf32>
    %45 = vector.extract_strided_slice %13 {offsets = [8, 0], sizes = [8, 128], strides = [1, 1]} : vector<64x128xf32> to vector<8x128xf32>
    %46 = arith.truncf %44 : vector<8x32xf32> to vector<8x32xbf16>
    %cst_16 = arith.constant dense<0.000000e+00> : vector<8x128xf32>
    %47 = tpu.matmul %46, %7, %cst_16 {dimension_numbers = #tpu.dot_dimension_numbers<[1], [0], [0], [1], [0, 0, 1, 1], [], []>} : vector<8x32xbf16>, vector<32x128xbf16>, vector<8x128xf32> -> vector<8x128xf32>
    %48 = arith.addf %45, %47 : vector<8x128xf32>
    %49 = arith.mulf %48, %22 : vector<8x128xf32>
    %50 = math.tanh %49 : vector<8x128xf32>
    %51 = arith.mulf %50, %22 : vector<8x128xf32>
    %52 = arith.addf %51, %25 : vector<8x128xf32>
    %53 = vector.extract_strided_slice %52 {offsets = [0, 0], sizes = [8, 32], strides = [1, 1]} : vector<8x128xf32> to vector<8x32xf32>
    %54 = vector.extract_strided_slice %52 {offsets = [0, 32], sizes = [8, 32], strides = [1, 1]} : vector<8x128xf32> to vector<8x32xf32>
    %55 = vector.extract_strided_slice %52 {offsets = [0, 64], sizes = [8, 32], strides = [1, 1]} : vector<8x128xf32> to vector<8x32xf32>
    %56 = vector.extract_strided_slice %52 {offsets = [0, 96], sizes = [8, 32], strides = [1, 1]} : vector<8x128xf32> to vector<8x32xf32>
    %57 = arith.mulf %54, %42 : vector<8x32xf32>
    %58 = arith.mulf %53, %55 : vector<8x32xf32>
    %59 = arith.addf %57, %58 : vector<8x32xf32>
    %60 = math.tanh %59 : vector<8x32xf32>
    %61 = arith.mulf %56, %60 : vector<8x32xf32>
    %62 = vector.extract_strided_slice %13 {offsets = [16, 0], sizes = [8, 128], strides = [1, 1]} : vector<64x128xf32> to vector<8x128xf32>
    %63 = arith.truncf %61 : vector<8x32xf32> to vector<8x32xbf16>
    %cst_17 = arith.constant dense<0.000000e+00> : vector<8x128xf32>
    %64 = tpu.matmul %63, %7, %cst_17 {dimension_numbers = #tpu.dot_dimension_numbers<[1], [0], [0], [1], [0, 0, 1, 1], [], []>} : vector<8x32xbf16>, vector<32x128xbf16>, vector<8x128xf32> -> vector<8x128xf32>
    %65 = arith.addf %62, %64 : vector<8x128xf32>
    %66 = arith.mulf %65, %22 : vector<8x128xf32>
    %67 = math.tanh %66 : vector<8x128xf32>
    %68 = arith.mulf %67, %22 : vector<8x128xf32>
    %69 = arith.addf %68, %25 : vector<8x128xf32>
    %70 = vector.extract_strided_slice %69 {offsets = [0, 0], sizes = [8, 32], strides = [1, 1]} : vector<8x128xf32> to vector<8x32xf32>
    %71 = vector.extract_strided_slice %69 {offsets = [0, 32], sizes = [8, 32], strides = [1, 1]} : vector<8x128xf32> to vector<8x32xf32>
    %72 = vector.extract_strided_slice %69 {offsets = [0, 64], sizes = [8, 32], strides = [1, 1]} : vector<8x128xf32> to vector<8x32xf32>
    %73 = vector.extract_strided_slice %69 {offsets = [0, 96], sizes = [8, 32], strides = [1, 1]} : vector<8x128xf32> to vector<8x32xf32>
    %74 = arith.mulf %71, %59 : vector<8x32xf32>
    %75 = arith.mulf %70, %72 : vector<8x32xf32>
    %76 = arith.addf %74, %75 : vector<8x32xf32>
    %77 = math.tanh %76 : vector<8x32xf32>
    %78 = arith.mulf %73, %77 : vector<8x32xf32>
    %79 = vector.extract_strided_slice %13 {offsets = [24, 0], sizes = [8, 128], strides = [1, 1]} : vector<64x128xf32> to vector<8x128xf32>
    %80 = arith.truncf %78 : vector<8x32xf32> to vector<8x32xbf16>
    %cst_18 = arith.constant dense<0.000000e+00> : vector<8x128xf32>
    %81 = tpu.matmul %80, %7, %cst_18 {dimension_numbers = #tpu.dot_dimension_numbers<[1], [0], [0], [1], [0, 0, 1, 1], [], []>} : vector<8x32xbf16>, vector<32x128xbf16>, vector<8x128xf32> -> vector<8x128xf32>
    %82 = arith.addf %79, %81 : vector<8x128xf32>
    %83 = arith.mulf %82, %22 : vector<8x128xf32>
    %84 = math.tanh %83 : vector<8x128xf32>
    %85 = arith.mulf %84, %22 : vector<8x128xf32>
    %86 = arith.addf %85, %25 : vector<8x128xf32>
    %87 = vector.extract_strided_slice %86 {offsets = [0, 0], sizes = [8, 32], strides = [1, 1]} : vector<8x128xf32> to vector<8x32xf32>
    %88 = vector.extract_strided_slice %86 {offsets = [0, 32], sizes = [8, 32], strides = [1, 1]} : vector<8x128xf32> to vector<8x32xf32>
    %89 = vector.extract_strided_slice %86 {offsets = [0, 64], sizes = [8, 32], strides = [1, 1]} : vector<8x128xf32> to vector<8x32xf32>
    %90 = vector.extract_strided_slice %86 {offsets = [0, 96], sizes = [8, 32], strides = [1, 1]} : vector<8x128xf32> to vector<8x32xf32>
    %91 = arith.mulf %88, %76 : vector<8x32xf32>
    %92 = arith.mulf %87, %89 : vector<8x32xf32>
    %93 = arith.addf %91, %92 : vector<8x32xf32>
    %94 = math.tanh %93 : vector<8x32xf32>
    %95 = arith.mulf %90, %94 : vector<8x32xf32>
    %96 = vector.extract_strided_slice %13 {offsets = [32, 0], sizes = [8, 128], strides = [1, 1]} : vector<64x128xf32> to vector<8x128xf32>
    %97 = arith.truncf %95 : vector<8x32xf32> to vector<8x32xbf16>
    %cst_19 = arith.constant dense<0.000000e+00> : vector<8x128xf32>
    %98 = tpu.matmul %97, %7, %cst_19 {dimension_numbers = #tpu.dot_dimension_numbers<[1], [0], [0], [1], [0, 0, 1, 1], [], []>} : vector<8x32xbf16>, vector<32x128xbf16>, vector<8x128xf32> -> vector<8x128xf32>
    %99 = arith.addf %96, %98 : vector<8x128xf32>
    %100 = arith.mulf %99, %22 : vector<8x128xf32>
    %101 = math.tanh %100 : vector<8x128xf32>
    %102 = arith.mulf %101, %22 : vector<8x128xf32>
    %103 = arith.addf %102, %25 : vector<8x128xf32>
    %104 = vector.extract_strided_slice %103 {offsets = [0, 0], sizes = [8, 32], strides = [1, 1]} : vector<8x128xf32> to vector<8x32xf32>
    %105 = vector.extract_strided_slice %103 {offsets = [0, 32], sizes = [8, 32], strides = [1, 1]} : vector<8x128xf32> to vector<8x32xf32>
    %106 = vector.extract_strided_slice %103 {offsets = [0, 64], sizes = [8, 32], strides = [1, 1]} : vector<8x128xf32> to vector<8x32xf32>
    %107 = vector.extract_strided_slice %103 {offsets = [0, 96], sizes = [8, 32], strides = [1, 1]} : vector<8x128xf32> to vector<8x32xf32>
    %108 = arith.mulf %105, %93 : vector<8x32xf32>
    %109 = arith.mulf %104, %106 : vector<8x32xf32>
    %110 = arith.addf %108, %109 : vector<8x32xf32>
    %111 = math.tanh %110 : vector<8x32xf32>
    %112 = arith.mulf %107, %111 : vector<8x32xf32>
    %113 = vector.extract_strided_slice %13 {offsets = [40, 0], sizes = [8, 128], strides = [1, 1]} : vector<64x128xf32> to vector<8x128xf32>
    %114 = arith.truncf %112 : vector<8x32xf32> to vector<8x32xbf16>
    %cst_20 = arith.constant dense<0.000000e+00> : vector<8x128xf32>
    %115 = tpu.matmul %114, %7, %cst_20 {dimension_numbers = #tpu.dot_dimension_numbers<[1], [0], [0], [1], [0, 0, 1, 1], [], []>} : vector<8x32xbf16>, vector<32x128xbf16>, vector<8x128xf32> -> vector<8x128xf32>
    %116 = arith.addf %113, %115 : vector<8x128xf32>
    %117 = arith.mulf %116, %22 : vector<8x128xf32>
    %118 = math.tanh %117 : vector<8x128xf32>
    %119 = arith.mulf %118, %22 : vector<8x128xf32>
    %120 = arith.addf %119, %25 : vector<8x128xf32>
    %121 = vector.extract_strided_slice %120 {offsets = [0, 0], sizes = [8, 32], strides = [1, 1]} : vector<8x128xf32> to vector<8x32xf32>
    %122 = vector.extract_strided_slice %120 {offsets = [0, 32], sizes = [8, 32], strides = [1, 1]} : vector<8x128xf32> to vector<8x32xf32>
    %123 = vector.extract_strided_slice %120 {offsets = [0, 64], sizes = [8, 32], strides = [1, 1]} : vector<8x128xf32> to vector<8x32xf32>
    %124 = vector.extract_strided_slice %120 {offsets = [0, 96], sizes = [8, 32], strides = [1, 1]} : vector<8x128xf32> to vector<8x32xf32>
    %125 = arith.mulf %122, %110 : vector<8x32xf32>
    %126 = arith.mulf %121, %123 : vector<8x32xf32>
    %127 = arith.addf %125, %126 : vector<8x32xf32>
    %128 = math.tanh %127 : vector<8x32xf32>
    %129 = arith.mulf %124, %128 : vector<8x32xf32>
    %130 = vector.extract_strided_slice %13 {offsets = [48, 0], sizes = [8, 128], strides = [1, 1]} : vector<64x128xf32> to vector<8x128xf32>
    %131 = arith.truncf %129 : vector<8x32xf32> to vector<8x32xbf16>
    %cst_21 = arith.constant dense<0.000000e+00> : vector<8x128xf32>
    %132 = tpu.matmul %131, %7, %cst_21 {dimension_numbers = #tpu.dot_dimension_numbers<[1], [0], [0], [1], [0, 0, 1, 1], [], []>} : vector<8x32xbf16>, vector<32x128xbf16>, vector<8x128xf32> -> vector<8x128xf32>
    %133 = arith.addf %130, %132 : vector<8x128xf32>
    %134 = arith.mulf %133, %22 : vector<8x128xf32>
    %135 = math.tanh %134 : vector<8x128xf32>
    %136 = arith.mulf %135, %22 : vector<8x128xf32>
    %137 = arith.addf %136, %25 : vector<8x128xf32>
    %138 = vector.extract_strided_slice %137 {offsets = [0, 0], sizes = [8, 32], strides = [1, 1]} : vector<8x128xf32> to vector<8x32xf32>
    %139 = vector.extract_strided_slice %137 {offsets = [0, 32], sizes = [8, 32], strides = [1, 1]} : vector<8x128xf32> to vector<8x32xf32>
    %140 = vector.extract_strided_slice %137 {offsets = [0, 64], sizes = [8, 32], strides = [1, 1]} : vector<8x128xf32> to vector<8x32xf32>
    %141 = vector.extract_strided_slice %137 {offsets = [0, 96], sizes = [8, 32], strides = [1, 1]} : vector<8x128xf32> to vector<8x32xf32>
    %142 = arith.mulf %139, %127 : vector<8x32xf32>
    %143 = arith.mulf %138, %140 : vector<8x32xf32>
    %144 = arith.addf %142, %143 : vector<8x32xf32>
    %145 = math.tanh %144 : vector<8x32xf32>
    %146 = arith.mulf %141, %145 : vector<8x32xf32>
    %147 = vector.extract_strided_slice %13 {offsets = [56, 0], sizes = [8, 128], strides = [1, 1]} : vector<64x128xf32> to vector<8x128xf32>
    %148 = arith.truncf %146 : vector<8x32xf32> to vector<8x32xbf16>
    %cst_22 = arith.constant dense<0.000000e+00> : vector<8x128xf32>
    %149 = tpu.matmul %148, %7, %cst_22 {dimension_numbers = #tpu.dot_dimension_numbers<[1], [0], [0], [1], [0, 0, 1, 1], [], []>} : vector<8x32xbf16>, vector<32x128xbf16>, vector<8x128xf32> -> vector<8x128xf32>
    %150 = arith.addf %147, %149 : vector<8x128xf32>
    %151 = arith.mulf %150, %22 : vector<8x128xf32>
    %152 = math.tanh %151 : vector<8x128xf32>
    %153 = arith.mulf %152, %22 : vector<8x128xf32>
    %154 = arith.addf %153, %25 : vector<8x128xf32>
    %155 = vector.extract_strided_slice %154 {offsets = [0, 0], sizes = [8, 32], strides = [1, 1]} : vector<8x128xf32> to vector<8x32xf32>
    %156 = vector.extract_strided_slice %154 {offsets = [0, 32], sizes = [8, 32], strides = [1, 1]} : vector<8x128xf32> to vector<8x32xf32>
    %157 = vector.extract_strided_slice %154 {offsets = [0, 64], sizes = [8, 32], strides = [1, 1]} : vector<8x128xf32> to vector<8x32xf32>
    %158 = vector.extract_strided_slice %154 {offsets = [0, 96], sizes = [8, 32], strides = [1, 1]} : vector<8x128xf32> to vector<8x32xf32>
    %159 = arith.mulf %156, %144 : vector<8x32xf32>
    %160 = arith.mulf %155, %157 : vector<8x32xf32>
    %161 = arith.addf %159, %160 : vector<8x32xf32>
    %162 = math.tanh %161 : vector<8x32xf32>
    %163 = arith.mulf %158, %162 : vector<8x32xf32>
    %cst_23 = arith.constant dense<0.000000e+00> : vector<8x128xf32>
    %164 = tpu.matmul %163, %3, %cst_23 {dimension_numbers = #tpu.dot_dimension_numbers<[1], [0], [0], [1], [0, 0, 1, 1], [], []>} : vector<8x32xf32>, vector<32x128xf32>, vector<8x128xf32> -> vector<8x128xf32>
    %165 = vector.broadcast %4 : vector<1x128xf32> to vector<8x128xf32>
    %166 = arith.addf %164, %165 : vector<8x128xf32>
    %cst_24 = arith.constant 0.000000e+00 : f32
    %167 = vector.broadcast %cst_24 : f32 to vector<8x128xf32>
    %168 = arith.maximumf %166, %167 : vector<8x128xf32>
    %cst_25 = arith.constant dense<0.000000e+00> : vector<8x128xf32>
    %169 = tpu.matmul %168, %5, %cst_25 {dimension_numbers = #tpu.dot_dimension_numbers<[1], [0], [0], [1], [0, 0, 1, 1], [], []>} : vector<8x128xf32>, vector<128x128xf32>, vector<8x128xf32> -> vector<8x128xf32>
    %170 = vector.broadcast %6 : vector<1x128xf32> to vector<8x128xf32>
    %171 = arith.addf %169, %170 : vector<8x128xf32>
    %cst_26 = arith.constant 0.000000e+00 : f32
    %172 = vector.broadcast %cst_26 : f32 to vector<8x128xf32>
    %173 = arith.maximumf %171, %172 : vector<8x128xf32>
    %c0_27 = arith.constant 0 : index
    %c0_28 = arith.constant 0 : index
    %174 = vector.load %arg2[%c0_27, %c0_28] : memref<8x128xf32, #tpu.memory_space<vmem>>, vector<8x128xf32>
    tpu.vector_store %arg2[%c0_27, %c0_28], %173 {strides = array<i32>} : memref<8x128xf32, #tpu.memory_space<vmem>>, vector<8x128xf32>,
    return
  }
}

</mosaic_0001>

<llo_original>
// kernel: tpu_custom_call.1
$region0: #{tpu_custom_call.1}
  #allocation0 [shape = 'u32[]', space=smem, size = 0x4, offset = 0x4, fixed_abs, tag = 'smem constant byte address 0x4 - core index']
  #allocation1 [shape = 'u32[144,128]{1,0:T(1,128)}', space=vmem, size = 0x12000, scoped, tag = 'internal scratch']
  %s0 = inlined_call_operand.vmem [shape: f32[64,16], index: 0, kind: input, shape index: {}]
  %s1 = inlined_call_operand.hbm [shape: f32[232,128], index: 1, kind: input, shape index: {}]
  %s2 = inlined_call_operand.hbm [shape: f32[8,128], index: 2, kind: output, shape index: {}]
  %s3 = sld [smem:[#allocation0]]
  $region22: #{tpu_custom_call.1} parent=0
    _
  %s5 = ssub.s32 1, %s3
  %s6 = scalar_select 0, %s5, %s3
  $region1: #{tpu_custom_call.1} parent=0
    #allocation2 [shape = 'u8[118784]{0}', space=vmem, size = 0x1d000, scoped, tag = 'input window, operand 1, single buffered']
    #allocation3 [shape = 's32[1]{0}', space=sflag, size = 0x4, scoped, tag = 'scoped memory for tpu_custom_call.1']
    #allocation4 [shape = 's32[1]{0}', space=sflag, size = 0x4, scoped, tag = 'scoped memory for tpu_custom_call.1']
    #allocation5 [shape = 'u8[4096]{0}', space=vmem, size = 0x1000, scoped, tag = 'output window, operand 0, single buffered']
    %7 = vsyncpa [#allocation3], 0
    %8 = vsyncpa [#allocation4], 0
    // Predicated region
    $region2: #{tpu_custom_call.1} parent=1 // pred_check
      _
    $region3: #{tpu_custom_call.1} parent=1 // pred_check_branch
      %10 = sbr.rel (0) target = $region5
    $region4: #{tpu_custom_call.1} parent=1 // pred_region
      _
    $region5: #{tpu_custom_call.1} parent=1 // pred_fallthru
      _
    // Predicated region
    $region6: #{tpu_custom_call.1} parent=1 // pred_check
      _
    $region7: #{tpu_custom_call.1} parent=1 // pred_check_branch
      %12 = sbr.rel (0) target = $region9
    $region8: #{tpu_custom_call.1} parent=1 // pred_region
      %s14 = ssub.s32 3712, 3712
      %15 = vsyncadd [#allocation3], %s14
      %s16 = sshll.u32 [#allocation2], 4
      %s17 = int_to_ptr.vmem [resolvable:$true] %s16
      %22 = dma.hbm_to_vmem [thread:$0]  %s1, 3712, %s17, [#allocation3], 128, 128, 8
    $region9: #{tpu_custom_call.1} parent=1 // pred_fallthru
      _
    // Predicated region
    $region10: #{tpu_custom_call.1} parent=1 // pred_check
      _
    $region11: #{tpu_custom_call.1} parent=1 // pred_check_branch
      %24 = sbr.rel (0) target = $region13
    $region12: #{tpu_custom_call.1} parent=1 // pred_region
      %25 = dma.done [#allocation3], 3712
    $region13: #{tpu_custom_call.1} parent=1 // pred_fallthru
      _
    %v27 = vld [vmem:[#allocation2] sm:$0xff]
    %v28 = vld [vmem:[#allocation2 + $0x8] sm:$0xff]
    %v29 = vld [vmem:[#allocation2 + $0x10] sm:$0xff]
    %v30 = vld [vmem:[#allocation2 + $0x18] sm:$0xff]
    %v31 = vld [vmem:[#allocation2 + $0x20] sm:$0xff]
    %v32 = vld [vmem:[#allocation2 + $0x28] sm:$0xff]
    %v33 = vld [vmem:[#allocation2 + $0x30] sm:$0x1]
    %v34 = vld [vmem:[#allocation2 + $0x38] sm:$0xff]
    %v35 = vld [vmem:[#allocation2 + $0x40] sm:$0xff]
    %v36 = vld [vmem:[#allocation2 + $0x48] sm:$0xff]
    %v37 = vld [vmem:[#allocation2 + $0x50] sm:$0xff]
    %v38 = vld [vmem:[#allocation2 + $0x58] sm:$0x1]
    %v39 = vld [vmem:[#allocation2 + $0x60] sm:$0xff]
    %v40 = vld [vmem:[#allocation2 + $0x68] sm:$0xff]
    %v41 = vld [vmem:[#allocation2 + $0x70] sm:$0xff]
    %v42 = vld [vmem:[#allocation2 + $0x78] sm:$0xff]
    %v43 = vld [vmem:[#allocation2 + $0x80] sm:$0xff]
    %v44 = vld [vmem:[#allocation2 + $0x88] sm:$0xff]
    %v45 = vld [vmem:[#allocation2 + $0x90] sm:$0xff]
    %v46 = vld [vmem:[#allocation2 + $0x98] sm:$0xff]
    %v47 = vld [vmem:[#allocation2 + $0xa0] sm:$0xff]
    %v48 = vld [vmem:[#allocation2 + $0xa8] sm:$0xff]
    %v49 = vld [vmem:[#allocation2 + $0xb0] sm:$0xff]
    %v50 = vld [vmem:[#allocation2 + $0xb8] sm:$0xff]
    %v51 = vld [vmem:[#allocation2 + $0xc0] sm:$0xff]
    %v52 = vld [vmem:[#allocation2 + $0xc8] sm:$0xff]
    %v53 = vld [vmem:[#allocation2 + $0xd0] sm:$0xff]
    %v54 = vld [vmem:[#allocation2 + $0xd8] sm:$0xff]
    %v55 = vld [vmem:[#allocation2 + $0xe0] sm:$0x1]
    %v56 = vpack.c.bf16 %v30, %v29
    %v57 = vpack.c.bf16 %v32, %v31
    %v58 = vld [vmem:[%s0] sm:$0xff]
    %v59 = vld [vmem:[%s0 + $0x8] sm:$0xff]
    %v60 = vld [vmem:[%s0 + $0x10] sm:$0xff]
    %v61 = vld [vmem:[%s0 + $0x18] sm:$0xff]
    %v62 = vld [vmem:[%s0 + $0x20] sm:$0xff]
    %v63 = vld [vmem:[%s0 + $0x28] sm:$0xff]
    %v64 = vld [vmem:[%s0 + $0x30] sm:$0xff]
    %v65 = vld [vmem:[%s0 + $0x38] sm:$0xff]
    %v66 = vpack.c.bf16 %v59, %v58
    %v67 = vpack.c.bf16 %v61, %v60
    %v68 = vpack.c.bf16 %v63, %v62
    %v69 = vpack.c.bf16 %v65, %v64
    %v70 = vpack.c.bf16 %v28, %v27
    %v71 = vlaneseq
    %v72 = vshrl.u32 %v71, 7
    %v73 = vsub.s32 0, %v72
    %v74 = vrot.slane %v33, %v73
    %vm75 = vcmask 130048
    %v77 = vsel %vm75, %v66, 0
    %v80 = vsel %vm75, %v67, 0
    %v83 = vsel %vm75, %v68, 0
    %v86 = vsel %vm75, %v69, 0
    %88 = vmatprep.subr.bf16.mxu0 0
    %89 = vmatpush1.bf16.msra.mxu0 %v70
    %90 = vmatprep.subr.bf16.mxu0 0
    %91 = vmatpush1.bf16.msra.mxu0 0
    %92 = vmatprep.subr.bf16.mxu0 0
    %93 = vmatpush1.bf16.msra.mxu0 0
    %94 = vmatprep.subr.bf16.mxu0 0
    %95 = vmatpush1.bf16.msra.mxu0 0
    %96 = vmatprep.subr.bf16.mxu0 0
    %97 = vmatpush1.bf16.msra.mxu0 0
    %98 = vmatprep.subr.bf16.mxu0 0
    %99 = vmatpush1.bf16.msra.mxu0 0
    %100 = vmatprep.subr.bf16.mxu0 0
    %101 = vmatpush1.bf16.msra.mxu0 0
    %102 = vmatprep.subr.bf16.mxu0 0
    %103 = vmatpush1.bf16.msra.mxu0 0
    %104 = vmatprep.subr.bf16.mxu0 0
    %105 = vmatpush1.bf16.msra.mxu0 0
    %106 = vmatprep.subr.bf16.mxu0 0
    %107 = vmatpush1.bf16.msra.mxu0 0
    %108 = vmatprep.subr.bf16.mxu0 0
    %109 = vmatpush1.bf16.msra.mxu0 0
    %110 = vmatprep.subr.bf16.mxu0 0
    %111 = vmatpush1.bf16.msra.mxu0 0
    %112 = vmatprep.subr.bf16.mxu0 0
    %113 = vmatpush1.bf16.msra.mxu0 0
    %114 = vmatprep.subr.bf16.mxu0 0
    %115 = vmatpush1.bf16.msra.mxu0 0
    %116 = vmatprep.subr.bf16.mxu0 0
    %117 = vmatpush1.bf16.msra.mxu0 0
    %118 = vmatprep.subr.bf16.mxu0 0
    %119 = vmatpush1.bf16.msra.mxu0 0
    %120 = vmatprep.mubr.bf16.mxu0 0
    %121 = vmatmul.mubr.bf16.gmra.mrb[0].mxu0 %v77
    %v122 = vpop.f32.mrb[0].mxu0
    %v123 = vadd.f32 %v74, %v122
    %v124 = vpop.f32.mrb[0].mxu0
    %v125 = vpop.f32.mrb[0].mxu0
    %v126 = vadd.f32 %v74, %v125
    %v127 = vpop.f32.mrb[0].mxu0
    %128 = vmatprep.mubr.bf16.mxu0 0
    %129 = vmatmul.mubr.bf16.gmra.mrb[0].mxu0 %v80
    %v130 = vpop.f32.mrb[0].mxu0
    %v131 = vadd.f32 %v74, %v130
    %v132 = vpop.f32.mrb[0].mxu0
    %v133 = vpop.f32.mrb[0].mxu0
    %v134 = vadd.f32 %v74, %v133
    %v135 = vpop.f32.mrb[0].mxu0
    %136 = vmatprep.mubr.bf16.mxu0 0
    %137 = vmatmul.mubr.bf16.gmra.mrb[0].mxu0 %v83
    %v138 = vpop.f32.mrb[0].mxu0
    %v139 = vadd.f32 %v74, %v138
    %v140 = vpop.f32.mrb[0].mxu0
    %v141 = vpop.f32.mrb[0].mxu0
    %v142 = vadd.f32 %v74, %v141
    %v143 = vpop.f32.mrb[0].mxu0
    %144 = vmatprep.mubr.bf16.mxu0 0
    %145 = vmatmul.mubr.bf16.gmra.mrb[0].mxu0 %v86
    %v146 = vpop.f32.mrb[0].mxu0
    %v147 = vadd.f32 %v74, %v146
    %v148 = vpop.f32.mrb[0].mxu0
    %v149 = vpop.f32.mrb[0].mxu0
    %v150 = vadd.f32 %v74, %v149
    %v151 = vpop.f32.mrb[0].mxu0
    %152 = vdwg.mxu0
    %v153 = vlaneseq
    %v154 = vand.u32 %v153, 127
    %vm155 = vcmp.ge.s32.totalorder %v154, 64
    %vm156 = vcmp.lt.s32.totalorder %v154, 96
    %vm157 = vmand %vm155, %vm156
    %v158 = vsel %vm157, 1.0, 0.5
    %v159 = vsel %vm157, 0.0, 0.5
    %vm160 = vcmask 261120
    %v162 = vsel %vm160, 0, 0
    %164 = vmatprep.subr.bf16.mxu0 0
    %165 = vmatpush1.bf16.msra.mxu0 %v56
    %166 = vmatprep.subr.bf16.mxu0 0
    %167 = vmatpush1.bf16.msra.mxu0 %v57
    %168 = vmatprep.subr.bf16.mxu0 0
    %169 = vmatpush1.bf16.msra.mxu0 0
    %170 = vmatprep.subr.bf16.mxu0 0
    %171 = vmatpush1.bf16.msra.mxu0 0
    %172 = vmatprep.subr.bf16.mxu0 0
    %173 = vmatpush1.bf16.msra.mxu0 0
    %174 = vmatprep.subr.bf16.mxu0 0
    %175 = vmatpush1.bf16.msra.mxu0 0
    %176 = vmatprep.subr.bf16.mxu0 0
    %177 = vmatpush1.bf16.msra.mxu0 0
    %178 = vmatprep.subr.bf16.mxu0 0
    %179 = vmatpush1.bf16.msra.mxu0 0
    %180 = vmatprep.subr.bf16.mxu0 0
    %181 = vmatpush1.bf16.msra.mxu0 0
    %182 = vmatprep.subr.bf16.mxu0 0
    %183 = vmatpush1.bf16.msra.mxu0 0
    %184 = vmatprep.subr.bf16.mxu0 0
    %185 = vmatpush1.bf16.msra.mxu0 0
    %186 = vmatprep.subr.bf16.mxu0 0
    %187 = vmatpush1.bf16.msra.mxu0 0
    %188 = vmatprep.subr.bf16.mxu0 0
    %189 = vmatpush1.bf16.msra.mxu0 0
    %190 = vmatprep.subr.bf16.mxu0 0
    %191 = vmatpush1.bf16.msra.mxu0 0
    %192 = vmatprep.subr.bf16.mxu0 0
    %193 = vmatpush1.bf16.msra.mxu0 0
    %194 = vmatprep.subr.bf16.mxu0 0
    %195 = vmatpush1.bf16.msra.mxu0 0
    %196 = vmatprep.mubr.bf16.mxu0 0
    %197 = vmatmul.mubr.bf16.gmra.mrb[0].mxu0 %v162
    %v198 = vpop.f32.mrb[0].mxu0
    %v199 = vadd.f32 0.0, %v198
    %v200 = vpop.f32.mrb[0].mxu0
    %v201 = vpop.f32.mrb[0].mxu0
    %v202 = vpop.f32.mrb[0].mxu0
    %203 = vdwg.mxu0
    %v204 = vadd.f32 %v123, %v199
    %v205 = vmul.f32 %v204, %v158
    %v206 = vtanh.pop %v205
    %v207 = vmul.f32 %v206, %v158
    %v208 = vadd.f32 %v207, %v159
    %v209 = vmul.f32 %v208, 0.0
    %211 = vrot.lane.b32.xlu0 %v208, 64
    %v212 = vpop.permute.xlu0 %211
    %v214 = vmul.f32 %v208, %v212
    %216 = vrot.lane.b32.xlu0 %v214, 32
    %v217 = vpop.permute.xlu0 %216
    %v219 = vadd.f32 %v209, %v217
    %v220 = vtanh.pop %v219
    %222 = vrot.lane.b32.xlu0 %v220, 64
    %v223 = vpop.permute.xlu0 %222
    %v225 = vmul.f32 %v208, %v223
    %v226 = vpack.c.bf16 %v225, %v225
    %228 = vrot.lane.b32.xlu0 %v226, 32
    %v229 = vpop.permute.xlu0 %228
    %v231 = vsel %vm160, %v229, 0
    %233 = vmatprep.subr.bf16.mxu0 0
    %234 = vmatpush1.bf16.msra.mxu0 %v56
    %235 = vmatprep.subr.bf16.mxu0 0
    %236 = vmatpush1.bf16.msra.mxu0 %v57
    %237 = vmatprep.subr.bf16.mxu0 0
    %238 = vmatpush1.bf16.msra.mxu0 0
    %239 = vmatprep.subr.bf16.mxu0 0
    %240 = vmatpush1.bf16.msra.mxu0 0
    %241 = vmatprep.subr.bf16.mxu0 0
    %242 = vmatpush1.bf16.msra.mxu0 0
    %243 = vmatprep.subr.bf16.mxu0 0
    %244 = vmatpush1.bf16.msra.mxu0 0
    %245 = vmatprep.subr.bf16.mxu0 0
    %246 = vmatpush1.bf16.msra.mxu0 0
    %247 = vmatprep.subr.bf16.mxu0 0
    %248 = vmatpush1.bf16.msra.mxu0 0
    %249 = vmatprep.subr.bf16.mxu0 0
    %250 = vmatpush1.bf16.msra.mxu0 0
    %251 = vmatprep.subr.bf16.mxu0 0
    %252 = vmatpush1.bf16.msra.mxu0 0
    %253 = vmatprep.subr.bf16.mxu0 0
    %254 = vmatpush1.bf16.msra.mxu0 0
    %255 = vmatprep.subr.bf16.mxu0 0
    %256 = vmatpush1.bf16.msra.mxu0 0
    %257 = vmatprep.subr.bf16.mxu0 0
    %258 = vmatpush1.bf16.msra.mxu0 0
    %259 = vmatprep.subr.bf16.mxu0 0
    %260 = vmatpush1.bf16.msra.mxu0 0
    %261 = vmatprep.subr.bf16.mxu0 0
    %262 = vmatpush1.bf16.msra.mxu0 0
    %263 = vmatprep.subr.bf16.mxu0 0
    %264 = vmatpush1.bf16.msra.mxu0 0
    %265 = vmatprep.mubr.bf16.mxu0 0
    %266 = vmatmul.mubr.bf16.gmra.mrb[0].mxu0 %v231
    %v267 = vpop.f32.mrb[0].mxu0
    %v268 = vadd.f32 0.0, %v267
    %v269 = vpop.f32.mrb[0].mxu0
    %v270 = vpop.f32.mrb[0].mxu0
    %v271 = vpop.f32.mrb[0].mxu0
    %272 = vdwg.mxu0
    %v273 = vadd.f32 %v126, %v268
    %v274 = vmul.f32 %v273, %v158
    %v275 = vtanh.pop %v274
    %v276 = vmul.f32 %v275, %v158
    %v277 = vadd.f32 %v276, %v159
    %v278 = vmul.f32 %v277, %v219
    %280 = vrot.lane.b32.xlu0 %v277, 64
    %v281 = vpop.permute.xlu0 %280
    %v283 = vmul.f32 %v277, %v281
    %285 = vrot.lane.b32.xlu0 %v283, 32
    %v286 = vpop.permute.xlu0 %285
    %v288 = vadd.f32 %v278, %v286
    %v289 = vtanh.pop %v288
    %291 = vrot.lane.b32.xlu0 %v289, 64
    %v292 = vpop.permute.xlu0 %291
    %v294 = vmul.f32 %v277, %v292
    %v295 = vpack.c.bf16 %v294, %v294
    %297 = vrot.lane.b32.xlu0 %v295, 32
    %v298 = vpop.permute.xlu0 %297
    %v300 = vsel %vm160, %v298, 0
    %302 = vmatprep.subr.bf16.mxu0 0
    %303 = vmatpush1.bf16.msra.mxu0 %v56
    %304 = vmatprep.subr.bf16.mxu0 0
    %305 = vmatpush1.bf16.msra.mxu0 %v57
    %306 = vmatprep.subr.bf16.mxu0 0
    %307 = vmatpush1.bf16.msra.mxu0 0
    %308 = vmatprep.subr.bf16.mxu0 0
    %309 = vmatpush1.bf16.msra.mxu0 0
    %310 = vmatprep.subr.bf16.mxu0 0
    %311 = vmatpush1.bf16.msra.mxu0 0
    %312 = vmatprep.subr.bf16.mxu0 0
    %313 = vmatpush1.bf16.msra.mxu0 0
    %314 = vmatprep.subr.bf16.mxu0 0
    %315 = vmatpush1.bf16.msra.mxu0 0
    %316 = vmatprep.subr.bf16.mxu0 0
    %317 = vmatpush1.bf16.msra.mxu0 0
    %318 = vmatprep.subr.bf16.mxu0 0
    %319 = vmatpush1.bf16.msra.mxu0 0
    %320 = vmatprep.subr.bf16.mxu0 0
    %321 = vmatpush1.bf16.msra.mxu0 0
    %322 = vmatprep.subr.bf16.mxu0 0
    %323 = vmatpush1.bf16.msra.mxu0 0
    %324 = vmatprep.subr.bf16.mxu0 0
    %325 = vmatpush1.bf16.msra.mxu0 0
    %326 = vmatprep.subr.bf16.mxu0 0
    %327 = vmatpush1.bf16.msra.mxu0 0
    %328 = vmatprep.subr.bf16.mxu0 0
    %329 = vmatpush1.bf16.msra.mxu0 0
    %330 = vmatprep.subr.bf16.mxu0 0
    %331 = vmatpush1.bf16.msra.mxu0 0
    %332 = vmatprep.subr.bf16.mxu0 0
    %333 = vmatpush1.bf16.msra.mxu0 0
    %334 = vmatprep.mubr.bf16.mxu0 0
    %335 = vmatmul.mubr.bf16.gmra.mrb[0].mxu0 %v300
    %v336 = vpop.f32.mrb[0].mxu0
    %v337 = vadd.f32 0.0, %v336
    %v338 = vpop.f32.mrb[0].mxu0
    %v339 = vpop.f32.mrb[0].mxu0
    %v340 = vpop.f32.mrb[0].mxu0
    %341 = vdwg.mxu0
    %v342 = vadd.f32 %v131, %v337
    %v343 = vmul.f32 %v342, %v158
    %v344 = vtanh.pop %v343
    %v345 = vmul.f32 %v344, %v158
    %v346 = vadd.f32 %v345, %v159
    %v347 = vmul.f32 %v346, %v288
    %349 = vrot.lane.b32.xlu0 %v346, 64
    %v350 = vpop.permute.xlu0 %349
    %v352 = vmul.f32 %v346, %v350
    %354 = vrot.lane.b32.xlu0 %v352, 32
    %v355 = vpop.permute.xlu0 %354
    %v357 = vadd.f32 %v347, %v355
    %v358 = vtanh.pop %v357
    %360 = vrot.lane.b32.xlu0 %v358, 64
    %v361 = vpop.permute.xlu0 %360
    %v363 = vmul.f32 %v346, %v361
    %v364 = vpack.c.bf16 %v363, %v363
    %366 = vrot.lane.b32.xlu0 %v364, 32
    %v367 = vpop.permute.xlu0 %366
    %v369 = vsel %vm160, %v367, 0
    %371 = vmatprep.subr.bf16.mxu0 0
    %372 = vmatpush1.bf16.msra.mxu0 %v56
    %373 = vmatprep.subr.bf16.mxu0 0
    %374 = vmatpush1.bf16.msra.mxu0 %v57
    %375 = vmatprep.subr.bf16.mxu0 0
    %376 = vmatpush1.bf16.msra.mxu0 0
    %377 = vmatprep.subr.bf16.mxu0 0
    %378 = vmatpush1.bf16.msra.mxu0 0
    %379 = vmatprep.subr.bf16.mxu0 0
    %380 = vmatpush1.bf16.msra.mxu0 0
    %381 = vmatprep.subr.bf16.mxu0 0
    %382 = vmatpush1.bf16.msra.mxu0 0
    %383 = vmatprep.subr.bf16.mxu0 0
    %384 = vmatpush1.bf16.msra.mxu0 0
    %385 = vmatprep.subr.bf16.mxu0 0
    %386 = vmatpush1.bf16.msra.mxu0 0
    %387 = vmatprep.subr.bf16.mxu0 0
    %388 = vmatpush1.bf16.msra.mxu0 0
    %389 = vmatprep.subr.bf16.mxu0 0
    %390 = vmatpush1.bf16.msra.mxu0 0
    %391 = vmatprep.subr.bf16.mxu0 0
    %392 = vmatpush1.bf16.msra.mxu0 0
    %393 = vmatprep.subr.bf16.mxu0 0
    %394 = vmatpush1.bf16.msra.mxu0 0
    %395 = vmatprep.subr.bf16.mxu0 0
    %396 = vmatpush1.bf16.msra.mxu0 0
    %397 = vmatprep.subr.bf16.mxu0 0
    %398 = vmatpush1.bf16.msra.mxu0 0
    %399 = vmatprep.subr.bf16.mxu0 0
    %400 = vmatpush1.bf16.msra.mxu0 0
    %401 = vmatprep.subr.bf16.mxu0 0
    %402 = vmatpush1.bf16.msra.mxu0 0
    %403 = vmatprep.mubr.bf16.mxu0 0
    %404 = vmatmul.mubr.bf16.gmra.mrb[0].mxu0 %v369
    %v405 = vpop.f32.mrb[0].mxu0
    %v406 = vadd.f32 0.0, %v405
    %v407 = vpop.f32.mrb[0].mxu0
    %v408 = vpop.f32.mrb[0].mxu0
    %v409 = vpop.f32.mrb[0].mxu0
    %410 = vdwg.mxu0
    %v411 = vadd.f32 %v134, %v406
    %v412 = vmul.f32 %v411, %v158
    %v413 = vtanh.pop %v412
    %v414 = vmul.f32 %v413, %v158
    %v415 = vadd.f32 %v414, %v159
    %v416 = vmul.f32 %v415, %v357
    %418 = vrot.lane.b32.xlu0 %v415, 64
    %v419 = vpop.permute.xlu0 %418
    %v421 = vmul.f32 %v415, %v419
    %423 = vrot.lane.b32.xlu0 %v421, 32
    %v424 = vpop.permute.xlu0 %423
    %v426 = vadd.f32 %v416, %v424
    %v427 = vtanh.pop %v426
    %429 = vrot.lane.b32.xlu0 %v427, 64
    %v430 = vpop.permute.xlu0 %429
    %v432 = vmul.f32 %v415, %v430
    %v433 = vpack.c.bf16 %v432, %v432
    %435 = vrot.lane.b32.xlu0 %v433, 32
    %v436 = vpop.permute.xlu0 %435
    %v438 = vsel %vm160, %v436, 0
    %440 = vmatprep.subr.bf16.mxu0 0
    %441 = vmatpush1.bf16.msra.mxu0 %v56
    %442 = vmatprep.subr.bf16.mxu0 0
    %443 = vmatpush1.bf16.msra.mxu0 %v57
    %444 = vmatprep.subr.bf16.mxu0 0
    %445 = vmatpush1.bf16.msra.mxu0 0
    %446 = vmatprep.subr.bf16.mxu0 0
    %447 = vmatpush1.bf16.msra.mxu0 0
    %448 = vmatprep.subr.bf16.mxu0 0
    %449 = vmatpush1.bf16.msra.mxu0 0
    %450 = vmatprep.subr.bf16.mxu0 0
    %451 = vmatpush1.bf16.msra.mxu0 0
    %452 = vmatprep.subr.bf16.mxu0 0
    %453 = vmatpush1.bf16.msra.mxu0 0
    %454 = vmatprep.subr.bf16.mxu0 0
    %455 = vmatpush1.bf16.msra.mxu0 0
    %456 = vmatprep.subr.bf16.mxu0 0
    %457 = vmatpush1.bf16.msra.mxu0 0
    %458 = vmatprep.subr.bf16.mxu0 0
    %459 = vmatpush1.bf16.msra.mxu0 0
    %460 = vmatprep.subr.bf16.mxu0 0
    %461 = vmatpush1.bf16.msra.mxu0 0
    %462 = vmatprep.subr.bf16.mxu0 0
    %463 = vmatpush1.bf16.msra.mxu0 0
    %464 = vmatprep.subr.bf16.mxu0 0
    %465 = vmatpush1.bf16.msra.mxu0 0
    %466 = vmatprep.subr.bf16.mxu0 0
    %467 = vmatpush1.bf16.msra.mxu0 0
    %468 = vmatprep.subr.bf16.mxu0 0
    %469 = vmatpush1.bf16.msra.mxu0 0
    %470 = vmatprep.subr.bf16.mxu0 0
    %471 = vmatpush1.bf16.msra.mxu0 0
    %472 = vmatprep.mubr.bf16.mxu0 0
    %473 = vmatmul.mubr.bf16.gmra.mrb[0].mxu0 %v438
    %v474 = vpop.f32.mrb[0].mxu0
    %v475 = vadd.f32 0.0, %v474
    %v476 = vpop.f32.mrb[0].mxu0
    %v477 = vpop.f32.mrb[0].mxu0
    %v478 = vpop.f32.mrb[0].mxu0
    %479 = vdwg.mxu0
    %v480 = vadd.f32 %v139, %v475
    %v481 = vmul.f32 %v480, %v158
    %v482 = vtanh.pop %v481
    %v483 = vmul.f32 %v482, %v158
    %v484 = vadd.f32 %v483, %v159
    %v485 = vmul.f32 %v484, %v426
    %487 = vrot.lane.b32.xlu0 %v484, 64
    %v488 = vpop.permute.xlu0 %487
    %v490 = vmul.f32 %v484, %v488
    %492 = vrot.lane.b32.xlu0 %v490, 32
    %v493 = vpop.permute.xlu0 %492
    %v495 = vadd.f32 %v485, %v493
    %v496 = vtanh.pop %v495
    %498 = vrot.lane.b32.xlu0 %v496, 64
    %v499 = vpop.permute.xlu0 %498
    %v501 = vmul.f32 %v484, %v499
    %v502 = vpack.c.bf16 %v501, %v501
    %504 = vrot.lane.b32.xlu0 %v502, 32
    %v505 = vpop.permute.xlu0 %504
    %v507 = vsel %vm160, %v505, 0
    %509 = vmatprep.subr.bf16.mxu0 0
    %510 = vmatpush1.bf16.msra.mxu0 %v56
    %511 = vmatprep.subr.bf16.mxu0 0
    %512 = vmatpush1.bf16.msra.mxu0 %v57
    %513 = vmatprep.subr.bf16.mxu0 0
    %514 = vmatpush1.bf16.msra.mxu0 0
    %515 = vmatprep.subr.bf16.mxu0 0
    %516 = vmatpush1.bf16.msra.mxu0 0
    %517 = vmatprep.subr.bf16.mxu0 0
    %518 = vmatpush1.bf16.msra.mxu0 0
    %519 = vmatprep.subr.bf16.mxu0 0
    %520 = vmatpush1.bf16.msra.mxu0 0
    %521 = vmatprep.subr.bf16.mxu0 0
    %522 = vmatpush1.bf16.msra.mxu0 0
    %523 = vmatprep.subr.bf16.mxu0 0
    %524 = vmatpush1.bf16.msra.mxu0 0
    %525 = vmatprep.subr.bf16.mxu0 0
    %526 = vmatpush1.bf16.msra.mxu0 0
    %527 = vmatprep.subr.bf16.mxu0 0
    %528 = vmatpush1.bf16.msra.mxu0 0
    %529 = vmatprep.subr.bf16.mxu0 0
    %530 = vmatpush1.bf16.msra.mxu0 0
    %531 = vmatprep.subr.bf16.mxu0 0
    %532 = vmatpush1.bf16.msra.mxu0 0
    %533 = vmatprep.subr.bf16.mxu0 0
    %534 = vmatpush1.bf16.msra.mxu0 0
    %535 = vmatprep.subr.bf16.mxu0 0
    %536 = vmatpush1.bf16.msra.mxu0 0
    %537 = vmatprep.subr.bf16.mxu0 0
    %538 = vmatpush1.bf16.msra.mxu0 0
    %539 = vmatprep.subr.bf16.mxu0 0
    %540 = vmatpush1.bf16.msra.mxu0 0
    %541 = vmatprep.mubr.bf16.mxu0 0
    %542 = vmatmul.mubr.bf16.gmra.mrb[0].mxu0 %v507
    %v543 = vpop.f32.mrb[0].mxu0
    %v544 = vadd.f32 0.0, %v543
    %v545 = vpop.f32.mrb[0].mxu0
    %v546 = vpop.f32.mrb[0].mxu0
    %v547 = vpop.f32.mrb[0].mxu0
    %548 = vdwg.mxu0
    %v549 = vadd.f32 %v142, %v544
    %v550 = vmul.f32 %v549, %v158
    %v551 = vtanh.pop %v550
    %v552 = vmul.f32 %v551, %v158
    %v553 = vadd.f32 %v552, %v159
    %v554 = vmul.f32 %v553, %v495
    %556 = vrot.lane.b32.xlu0 %v553, 64
    %v557 = vpop.permute.xlu0 %556
    %v559 = vmul.f32 %v553, %v557
    %561 = vrot.lane.b32.xlu0 %v559, 32
    %v562 = vpop.permute.xlu0 %561
    %v564 = vadd.f32 %v554, %v562
    %v565 = vtanh.pop %v564
    %567 = vrot.lane.b32.xlu0 %v565, 64
    %v568 = vpop.permute.xlu0 %567
    %v570 = vmul.f32 %v553, %v568
    %v571 = vpack.c.bf16 %v570, %v570
    %573 = vrot.lane.b32.xlu0 %v571, 32
    %v574 = vpop.permute.xlu0 %573
    %v576 = vsel %vm160, %v574, 0
    %578 = vmatprep.subr.bf16.mxu0 0
    %579 = vmatpush1.bf16.msra.mxu0 %v56
    %580 = vmatprep.subr.bf16.mxu0 0
    %581 = vmatpush1.bf16.msra.mxu0 %v57
    %582 = vmatprep.subr.bf16.mxu0 0
    %583 = vmatpush1.bf16.msra.mxu0 0
    %584 = vmatprep.subr.bf16.mxu0 0
    %585 = vmatpush1.bf16.msra.mxu0 0
    %586 = vmatprep.subr.bf16.mxu0 0
    %587 = vmatpush1.bf16.msra.mxu0 0
    %588 = vmatprep.subr.bf16.mxu0 0
    %589 = vmatpush1.bf16.msra.mxu0 0
    %590 = vmatprep.subr.bf16.mxu0 0
    %591 = vmatpush1.bf16.msra.mxu0 0
    %592 = vmatprep.subr.bf16.mxu0 0
    %593 = vmatpush1.bf16.msra.mxu0 0
    %594 = vmatprep.subr.bf16.mxu0 0
    %595 = vmatpush1.bf16.msra.mxu0 0
    %596 = vmatprep.subr.bf16.mxu0 0
    %597 = vmatpush1.bf16.msra.mxu0 0
    %598 = vmatprep.subr.bf16.mxu0 0
    %599 = vmatpush1.bf16.msra.mxu0 0
    %600 = vmatprep.subr.bf16.mxu0 0
    %601 = vmatpush1.bf16.msra.mxu0 0
    %602 = vmatprep.subr.bf16.mxu0 0
    %603 = vmatpush1.bf16.msra.mxu0 0
    %604 = vmatprep.subr.bf16.mxu0 0
    %605 = vmatpush1.bf16.msra.mxu0 0
    %606 = vmatprep.subr.bf16.mxu0 0
    %607 = vmatpush1.bf16.msra.mxu0 0
    %608 = vmatprep.subr.bf16.mxu0 0
    %609 = vmatpush1.bf16.msra.mxu0 0
    %610 = vmatprep.mubr.bf16.mxu0 0
    %611 = vmatmul.mubr.bf16.gmra.mrb[0].mxu0 %v576
    %v612 = vpop.f32.mrb[0].mxu0
    %v613 = vadd.f32 0.0, %v612
    %v614 = vpop.f32.mrb[0].mxu0
    %v615 = vpop.f32.mrb[0].mxu0
    %v616 = vpop.f32.mrb[0].mxu0
    %617 = vdwg.mxu0
    %v618 = vadd.f32 %v147, %v613
    %v619 = vmul.f32 %v618, %v158
    %v620 = vtanh.pop %v619
    %v621 = vmul.f32 %v620, %v158
    %v622 = vadd.f32 %v621, %v159
    %v623 = vmul.f32 %v622, %v564
    %625 = vrot.lane.b32.xlu0 %v622, 64
    %v626 = vpop.permute.xlu0 %625
    %v628 = vmul.f32 %v622, %v626
    %630 = vrot.lane.b32.xlu0 %v628, 32
    %v631 = vpop.permute.xlu0 %630
    %v633 = vadd.f32 %v623, %v631
    %v634 = vtanh.pop %v633
    %636 = vrot.lane.b32.xlu0 %v634, 64
    %v637 = vpop.permute.xlu0 %636
    %v639 = vmul.f32 %v622, %v637
    %v640 = vpack.c.bf16 %v639, %v639
    %642 = vrot.lane.b32.xlu0 %v640, 32
    %v643 = vpop.permute.xlu0 %642
    %v645 = vsel %vm160, %v643, 0
    %647 = vmatprep.subr.bf16.mxu0 0
    %648 = vmatpush1.bf16.msra.mxu0 %v56
    %649 = vmatprep.subr.bf16.mxu0 0
    %650 = vmatpush1.bf16.msra.mxu0 %v57
    %651 = vmatprep.subr.bf16.mxu0 0
    %652 = vmatpush1.bf16.msra.mxu0 0
    %653 = vmatprep.subr.bf16.mxu0 0
    %654 = vmatpush1.bf16.msra.mxu0 0
    %655 = vmatprep.subr.bf16.mxu0 0
    %656 = vmatpush1.bf16.msra.mxu0 0
    %657 = vmatprep.subr.bf16.mxu0 0
    %658 = vmatpush1.bf16.msra.mxu0 0
    %659 = vmatprep.subr.bf16.mxu0 0
    %660 = vmatpush1.bf16.msra.mxu0 0
    %661 = vmatprep.subr.bf16.mxu0 0
    %662 = vmatpush1.bf16.msra.mxu0 0
    %663 = vmatprep.subr.bf16.mxu0 0
    %664 = vmatpush1.bf16.msra.mxu0 0
    %665 = vmatprep.subr.bf16.mxu0 0
    %666 = vmatpush1.bf16.msra.mxu0 0
    %667 = vmatprep.subr.bf16.mxu0 0
    %668 = vmatpush1.bf16.msra.mxu0 0
    %669 = vmatprep.subr.bf16.mxu0 0
    %670 = vmatpush1.bf16.msra.mxu0 0
    %671 = vmatprep.subr.bf16.mxu0 0
    %672 = vmatpush1.bf16.msra.mxu0 0
    %673 = vmatprep.subr.bf16.mxu0 0
    %674 = vmatpush1.bf16.msra.mxu0 0
    %675 = vmatprep.subr.bf16.mxu0 0
    %676 = vmatpush1.bf16.msra.mxu0 0
    %677 = vmatprep.subr.bf16.mxu0 0
    %678 = vmatpush1.bf16.msra.mxu0 0
    %679 = vmatprep.mubr.bf16.mxu0 0
    %680 = vmatmul.mubr.bf16.gmra.mrb[0].mxu0 %v645
    %v681 = vpop.f32.mrb[0].mxu0
    %v682 = vadd.f32 0.0, %v681
    %v683 = vpop.f32.mrb[0].mxu0
    %v684 = vpop.f32.mrb[0].mxu0
    %v685 = vpop.f32.mrb[0].mxu0
    %686 = vdwg.mxu0
    %v687 = vadd.f32 %v150, %v682
    %v688 = vmul.f32 %v687, %v158
    %v689 = vtanh.pop %v688
    %v690 = vmul.f32 %v689, %v158
    %v691 = vadd.f32 %v690, %v159
    %v692 = vmul.f32 %v691, %v633
    %694 = vrot.lane.b32.xlu0 %v691, 64
    %v695 = vpop.permute.xlu0 %694
    %v697 = vmul.f32 %v691, %v695
    %699 = vrot.lane.b32.xlu0 %v697, 32
    %v700 = vpop.permute.xlu0 %699
    %v702 = vadd.f32 %v692, %v700
    %v703 = vtanh.pop %v702
    %705 = vrot.lane.b32.xlu0 %v703, 64
    %v706 = vpop.permute.xlu0 %705
    %v708 = vmul.f32 %v691, %v706
    %v709 = vlaneseq
    %v710 = vshrl.u32 %v709, 7
    %v711 = vsub.s32 0, %v710
    %v712 = vrot.slane %v38, %v711
    %714 = vrot.lane.b32.xlu0 %v708, 32
    %v715 = vpop.permute.xlu0 %714
    %v716 = vsel %vm160, %v715, 0
    %718 = vmatprep.subr.mxu0 0.0
    %719 = vmatpush1.msra.mxu0 %v34
    %720 = vmatprep.subr.mxu0 0.0
    %721 = vmatpush1.msra.mxu0 %v35
    %722 = vmatprep.subr.mxu0 0.0
    %723 = vmatpush1.msra.mxu0 %v36
    %724 = vmatprep.subr.mxu0 0.0
    %725 = vmatpush1.msra.mxu0 %v37
    %726 = vmatprep.subr.mxu0 0.0
    %727 = vmatpush1.msra.mxu0 0.0
    %728 = vmatprep.subr.mxu0 0.0
    %729 = vmatpush1.msra.mxu0 0.0
    %730 = vmatprep.subr.mxu0 0.0
    %731 = vmatpush1.msra.mxu0 0.0
    %732 = vmatprep.subr.mxu0 0.0
    %733 = vmatpush1.msra.mxu0 0.0
    %734 = vmatprep.subr.mxu0 0.0
    %735 = vmatpush1.msra.mxu0 0.0
    %736 = vmatprep.subr.mxu0 0.0
    %737 = vmatpush1.msra.mxu0 0.0
    %738 = vmatprep.subr.mxu0 0.0
    %739 = vmatpush1.msra.mxu0 0.0
    %740 = vmatprep.subr.mxu0 0.0
    %741 = vmatpush1.msra.mxu0 0.0
    %742 = vmatprep.subr.mxu0 0.0
    %743 = vmatpush1.msra.mxu0 0.0
    %744 = vmatprep.subr.mxu0 0.0
    %745 = vmatpush1.msra.mxu0 0.0
    %746 = vmatprep.subr.mxu0 0.0
    %747 = vmatpush1.msra.mxu0 0.0
    %748 = vmatprep.subr.mxu0 0.0
    %749 = vmatpush1.msra.mxu0 0.0
    %750 = vmatprep.subr.mxu0 0.0
    %751 = vmatpush1.msra.mxu0 0.0
    %752 = vmatprep.subr.mxu0 0.0
    %753 = vmatpush1.msra.mxu0 0.0
    %754 = vmatprep.subr.mxu0 0.0
    %755 = vmatpush1.msra.mxu0 0.0
    %756 = vmatprep.subr.mxu0 0.0
    %757 = vmatpush1.msra.mxu0 0.0
    %758 = vmatprep.subr.mxu0 0.0
    %759 = vmatpush1.msra.mxu0 0.0
    %760 = vmatprep.subr.mxu0 0.0
    %761 = vmatpush1.msra.mxu0 0.0
    %762 = vmatprep.subr.mxu0 0.0
    %763 = vmatpush1.msra.mxu0 0.0
    %764 = vmatprep.subr.mxu0 0.0
    %765 = vmatpush1.msra.mxu0 0.0
    %766 = vmatprep.subr.mxu0 0.0
    %767 = vmatpush1.msra.mxu0 0.0
    %768 = vmatprep.subr.mxu0 0.0
    %769 = vmatpush1.msra.mxu0 0.0
    %770 = vmatprep.subr.mxu0 0.0
    %771 = vmatpush1.msra.mxu0 0.0
    %772 = vmatprep.subr.mxu0 0.0
    %773 = vmatpush1.msra.mxu0 0.0
    %774 = vmatprep.subr.mxu0 0.0
    %775 = vmatpush1.msra.mxu0 0.0
    %776 = vmatprep.subr.mxu0 0.0
    %777 = vmatpush1.msra.mxu0 0.0
    %778 = vmatprep.subr.mxu0 0.0
    %779 = vmatpush1.msra.mxu0 0.0
    %780 = vmatprep.subr.mxu0 0.0
    %781 = vmatpush1.msra.mxu0 0.0
    %782 = vmatprep.mubr.f32.mxu0 0.0
    %783 = vmatmul.mubr.f32.gmra.mrb[0].mxu0 %v716
    %v784 = vpop.f32.mrb[0].mxu0
    %v785 = vadd.f32 %v712, %v784
    %v786 = vpop.f32.mrb[0].mxu0
    %787 = vdwg.mxu0
    %v788 = vmax.f32 %v785, 0.0
    %v789 = vlaneseq
    %v790 = vshrl.u32 %v789, 7
    %v791 = vsub.s32 0, %v790
    %v792 = vrot.slane %v55, %v791
    %793 = vmatprep.subr.mxu0 0.0
    %794 = vmatpush1.msra.mxu0 %v39
    %795 = vmatprep.subr.mxu0 0.0
    %796 = vmatpush1.msra.mxu0 %v40
    %797 = vmatprep.subr.mxu0 0.0
    %798 = vmatpush1.msra.mxu0 %v41
    %799 = vmatprep.subr.mxu0 0.0
    %800 = vmatpush1.msra.mxu0 %v42
    %801 = vmatprep.subr.mxu0 0.0
    %802 = vmatpush1.msra.mxu0 %v43
    %803 = vmatprep.subr.mxu0 0.0
    %804 = vmatpush1.msra.mxu0 %v44
    %805 = vmatprep.subr.mxu0 0.0
    %806 = vmatpush1.msra.mxu0 %v45
    %807 = vmatprep.subr.mxu0 0.0
    %808 = vmatpush1.msra.mxu0 %v46
    %809 = vmatprep.subr.mxu0 0.0
    %810 = vmatpush1.msra.mxu0 %v47
    %811 = vmatprep.subr.mxu0 0.0
    %812 = vmatpush1.msra.mxu0 %v48
    %813 = vmatprep.subr.mxu0 0.0
    %814 = vmatpush1.msra.mxu0 %v49
    %815 = vmatprep.subr.mxu0 0.0
    %816 = vmatpush1.msra.mxu0 %v50
    %817 = vmatprep.subr.mxu0 0.0
    %818 = vmatpush1.msra.mxu0 %v51
    %819 = vmatprep.subr.mxu0 0.0
    %820 = vmatpush1.msra.mxu0 %v52
    %821 = vmatprep.subr.mxu0 0.0
    %822 = vmatpush1.msra.mxu0 %v53
    %823 = vmatprep.subr.mxu0 0.0
    %824 = vmatpush1.msra.mxu0 %v54
    %825 = vmatprep.subr.mxu0 0.0
    %826 = vmatpush1.msra.mxu0 0.0
    %827 = vmatprep.subr.mxu0 0.0
    %828 = vmatpush1.msra.mxu0 0.0
    %829 = vmatprep.subr.mxu0 0.0
    %830 = vmatpush1.msra.mxu0 0.0
    %831 = vmatprep.subr.mxu0 0.0
    %832 = vmatpush1.msra.mxu0 0.0
    %833 = vmatprep.subr.mxu0 0.0
    %834 = vmatpush1.msra.mxu0 0.0
    %835 = vmatprep.subr.mxu0 0.0
    %836 = vmatpush1.msra.mxu0 0.0
    %837 = vmatprep.subr.mxu0 0.0
    %838 = vmatpush1.msra.mxu0 0.0
    %839 = vmatprep.subr.mxu0 0.0
    %840 = vmatpush1.msra.mxu0 0.0
    %841 = vmatprep.subr.mxu0 0.0
    %842 = vmatpush1.msra.mxu0 0.0
    %843 = vmatprep.subr.mxu0 0.0
    %844 = vmatpush1.msra.mxu0 0.0
    %845 = vmatprep.subr.mxu0 0.0
    %846 = vmatpush1.msra.mxu0 0.0
    %847 = vmatprep.subr.mxu0 0.0
    %848 = vmatpush1.msra.mxu0 0.0
    %849 = vmatprep.subr.mxu0 0.0
    %850 = vmatpush1.msra.mxu0 0.0
    %851 = vmatprep.subr.mxu0 0.0
    %852 = vmatpush1.msra.mxu0 0.0
    %853 = vmatprep.subr.mxu0 0.0
    %854 = vmatpush1.msra.mxu0 0.0
    %855 = vmatprep.subr.mxu0 0.0
    %856 = vmatpush1.msra.mxu0 0.0
    %857 = vmatprep.mubr.f32.mxu0 0.0
    %858 = vmatmul.mubr.f32.gmra.mrb[0].mxu0 %v788
    %v859 = vpop.f32.mrb[0].mxu0
    %v860 = vadd.f32 %v792, %v859
    %v861 = vpop.f32.mrb[0].mxu0
    %862 = vdwg.mxu0
    %v863 = vmax.f32 %v860, 0.0
    %864 = vst [vmem:[#allocation5] sm:$0xff] %v863
    // Predicated region
    $region14: #{tpu_custom_call.1} parent=1 // pred_check
      _
    $region15: #{tpu_custom_call.1} parent=1 // pred_check_branch
      %866 = sbr.rel (0) target = $region17
    $region16: #{tpu_custom_call.1} parent=1 // pred_region
      %s868 = ssub.s32 128, 128
      %869 = vsyncadd [#allocation4], %s868
      %s871 = sshll.u32 [#allocation5], 4
      %s872 = int_to_ptr.vmem [resolvable:$true] %s871
      %874 = dma.vmem_to_hbm [thread:$0]  %s872, 128, %s2, [#allocation4]
    $region17: #{tpu_custom_call.1} parent=1 // pred_fallthru
      _
    // Predicated region
    $region18: #{tpu_custom_call.1} parent=1 // pred_check
      _
    $region19: #{tpu_custom_call.1} parent=1 // pred_check_branch
      %876 = sbr.rel (0) target = $region21
    $region20: #{tpu_custom_call.1} parent=1 // pred_region
      %877 = dma.done [#allocation4], 128
    $region21: #{tpu_custom_call.1} parent=1 // pred_fallthru
      _
    %878 = vsyncpa [#allocation3], 1
    %879 = vsyncpa [#allocation4], 1

</llo_original>
